<compile_context>
chip_gen: v6e
topology: v6e:2x2x1
jax: 0.10.0
libtpu: 0.0.40
codegen_flags: <defaults>
</compile_context>

<pallas_src>
from functools import partial

import jax
import jax.numpy as jnp
from jax.experimental import pallas as pl
from jax.experimental.pallas import tpu as pltpu


def _round_up(x, m):
    return ((x + m - 1) // m) * m


def _pick_tile(total, candidates):
    for c in candidates:
        if total % c == 0:
            return c
    return total


def rnn_recurrence_kernel(p_ref, h0_ref, w_hh_ref, y_ref, hN_ref, h_scr,
                          *, tt, last_block, last_local):
    """One grid step == `tt` RNN time steps (serial recurrence, time-blocked).

    p_ref:  (tt, Bp, Hp) f32   precomputed x_t @ W_ih^T + b_ih + b_hh
    h0_ref: (Bp, Hp)     f32   initial hidden state
    w_hh:   (Hp, Hp)     bf16  recurrent weight (transposed), resident
    y_ref:  (tt, Bp, Hp) bf16  hidden sequence output (head consumes bf16)
    hN_ref: (Bp, Hp)     f32   exact final hidden state (captured at t = T-1)
    h_scr:  (Bp, Hp)     f32   hidden state carried across grid steps
    """
    @pl.when(pl.program_id(0) == 0)
    def _():
        h_scr[...] = h0_ref[...]
        hN_ref[...] = h0_ref[...]

    w_hh = w_hh_ref[...]                       # resident bf16 (Hp, Hp)
    h = h_scr[...]                             # (Bp, Hp) f32

    # statically unrolled time-block; only the (B,H)@(H,H) matmul is serial
    for i in range(tt):
        pre = p_ref[i] + jnp.dot(h.astype(jnp.bfloat16), w_hh,
                                 preferred_element_type=jnp.float32)
        h = jnp.tanh(pre)
        y_ref[i] = h.astype(y_ref.dtype)
        if i == last_local:                    # static: capture exact state at t = T-1
            @pl.when(pl.program_id(0) == last_block)
            def _(h=h):
                hN_ref[...] = h

    h_scr[...] = h                             # carry to next grid step


def head_kernel(y_ref, w_ref, b_ref, o_ref):
    """logits tile = Y_tile @ W_out^T_tile + b_tile (bf16 MXU, f32 accumulate)."""
    o_ref[...] = (jnp.dot(y_ref[...], w_ref[...],
                          preferred_element_type=jnp.float32)
                  + b_ref[...])


def rnn_model_forward(X, state, params, *, tt=8):
    """X: (B, T) int tokens. state: (1, B, H) f32. Returns (logits (T*B, V), state (1, B, H))."""
    w_ih, w_hh, b_ih, b_hh, w_lin, b_lin = params
    H, V = w_ih.shape                                  # PyTorch weight_ih_l0: (H, V)
    B, T = X.shape

    # ---- lane/sublane-dense padded sizes -------------------------------------
    B_pad = _round_up(B, 8)
    H_pad = _round_up(H, 128)
    V_pad = _round_up(V, 128)
    TT = min(tt, T)
    T_pad = _round_up(T, TT)
    last_block = (T - 1) // TT                         # grid step containing t = T-1
    last_local = (T - 1) % TT                          # local index within that block

    # ---- hoisted input projection: gather instead of one-hot matmul ---------
    # x_t is one-hot, so x_t @ W_ih^T == W_ih^T[token_t]; fold both biases in.
    w_ih_t = jnp.zeros((V, H_pad), jnp.float32).at[:, :H].set(w_ih.T)
    b_h = jnp.zeros((H_pad,), jnp.float32).at[:H].set(b_ih + b_hh)
    tokens = jnp.zeros((T_pad, B_pad), jnp.int32).at[:T, :B].set(X.T.astype(jnp.int32))
    P = jnp.take(w_ih_t, tokens, axis=0) + b_h         # (T_pad, B_pad, H_pad) f32

    # ---- padded bf16 weights (zero padding keeps the math exact) ------------
    w_hh_t = (jnp.zeros((H_pad, H_pad), jnp.float32)
              .at[:H, :H].set(w_hh.T).astype(jnp.bfloat16))
    w_out_t = (jnp.zeros((H_pad, V_pad), jnp.float32)
               .at[:H, :V].set(w_lin.T).astype(jnp.bfloat16))
    b_out = jnp.zeros((1, V_pad), jnp.float32).at[0, :V].set(b_lin)

    h0 = jnp.zeros((B_pad, H_pad), jnp.float32).at[:B, :H].set(state[0])

    # ---- serial recurrence kernel (time-blocked) -----------------------------
    y_pad, h_last = pl.pallas_call(
        partial(rnn_recurrence_kernel, tt=TT,
                last_block=last_block, last_local=last_local),
        out_shape=(jax.ShapeDtypeStruct((T_pad, B_pad, H_pad), jnp.bfloat16),
                   jax.ShapeDtypeStruct((B_pad, H_pad), jnp.float32)),
        grid_spec=pltpu.PrefetchScalarGridSpec(
            num_scalar_prefetch=0,
            grid=(T_pad // TT,),
            in_specs=[
                pl.BlockSpec((TT, B_pad, H_pad), lambda t: (t, 0, 0)),   # P block
                pl.BlockSpec((B_pad, H_pad), lambda t: (0, 0)),          # h0
                pl.BlockSpec((H_pad, H_pad), lambda t: (0, 0)),          # W_hh^T (bf16)
            ],
            out_specs=(
                pl.BlockSpec((TT, B_pad, H_pad), lambda t: (t, 0, 0)),   # Y (bf16)
                pl.BlockSpec((B_pad, H_pad), lambda t: (0, 0)),          # final state (f32)
            ),
            scratch_shapes=[pltpu.VMEM((B_pad, H_pad), jnp.float32)],
        ),
        compiler_params=pltpu.CompilerParams(
            dimension_semantics=("arbitrary",)),   # recurrence -> serial time axis
    )(P, h0, w_hh_t)

    new_state = h_last[:B, :H][None]                   # (1, B, H) exact f32

    # ---- hoisted Linear head: one tiled matmul over all T*B rows ------------
    M = T * B
    M_pad = _round_up(M, 8)
    y2d = jnp.zeros((M_pad, H_pad), jnp.bfloat16).at[:M].set(
        y_pad[:T, :B, :].reshape(M, H_pad))            # time-major row order, bf16

    TM = _pick_tile(M_pad, (512, 256, 128))            # falls back to M_pad (mult of 8)
    TN = _pick_tile(V_pad, (512, 256, 128))            # vocab-tiled -> v7x VMEM friendly

    logits_pad = pl.pallas_call(
        head_kernel,
        out_shape=jax.ShapeDtypeStruct((M_pad, V_pad), jnp.float32),
        grid_spec=pltpu.PrefetchScalarGridSpec(
            num_scalar_prefetch=0,
            grid=(M_pad // TM, V_pad // TN),
            in_specs=[
                pl.BlockSpec((TM, H_pad), lambda i, j: (i, 0)),          # Y rows (bf16)
                pl.BlockSpec((H_pad, TN), lambda i, j: (0, j)),          # W_out^T tile
                pl.BlockSpec((1, TN), lambda i, j: (0, j)),              # b_out tile
            ],
            out_specs=pl.BlockSpec((TM, TN), lambda i, j: (i, j)),
        ),
        compiler_params=pltpu.CompilerParams(
            dimension_semantics=("parallel", "parallel")),   # both TCs on v7x
    )(y2d, w_out_t, b_out)

    outputs = logits_pad[:M, :V]                       # (T*B, V)
    return outputs, new_state


def _reference_forward(X, state, params):
    """Pure-JAX f32 reference of the same PyTorch forward (for verification)."""
    w_ih, w_hh, b_ih, b_hh, w_lin, b_lin = params
    V = w_ih.shape[1]
    x_oh = jax.nn.one_hot(X.T, V, dtype=jnp.float32)   # (T, B, V)

    def step(h, x_t):
        h = jnp.tanh(x_t @ w_ih.T + b_ih + h @ w_hh.T + b_hh)
        return h, h

    h_last, ys = jax.lax.scan(step, state[0], x_oh)
    outputs = ys.reshape(-1, ys.shape[-1]) @ w_lin.T + b_lin
    return outputs, h_last[None]


if __name__ == "__main__":
    B, T = 4, 8          # batch, sequence length
    V, H = 32, 32        # vocab_size, num_hiddens (num_layers = 1)

    key = jax.random.PRNGKey(0)
    ks = jax.random.split(key, 7)
    scale = 1.0 / jnp.sqrt(H)
    params = (
        jax.random.uniform(ks[0], (H, V), jnp.float32, -scale, scale),  # weight_ih_l0
        jax.random.uniform(ks[1], (H, H), jnp.float32, -scale, scale),  # weight_hh_l0
        jax.random.uniform(ks[2], (H,),   jnp.float32, -scale, scale),  # bias_ih_l0
        jax.random.uniform(ks[3], (H,),   jnp.float32, -scale, scale),  # bias_hh_l0
        jax.random.uniform(ks[4], (V, H), jnp.float32, -scale, scale),  # linear.weight
        jax.random.uniform(ks[5], (V,),   jnp.float32, -scale, scale),  # linear.bias
    )

    X = jax.random.randint(ks[6], (B, T), 0, V, dtype=jnp.int32)
    state0 = jnp.zeros((1, B, H), jnp.float32)          # begin_state for nn.RNN

    outputs, new_state = jax.block_until_ready(rnn_model_forward(X, state0, params))

    ref_out, ref_state = _reference_forward(X, state0, params)
    assert outputs.shape == (T * B, V) and new_state.shape == (1, B, H)
    # bf16 matmul operands / bf16 Y buffer (f32 accumulation) -> loosened tolerance
    assert jnp.allclose(outputs, ref_out, atol=5e-2, rtol=5e-2)
    assert jnp.allclose(new_state, ref_state, atol=5e-2, rtol=5e-2)

    print("KERNEL_OK")
</pallas_src>

<mosaic_0001>
module attributes {stable_mosaic.version = 11 : i64} {
  func.func @rnn_recurrence_kernel(%arg0: i32, %arg1: memref<8x8x128xf32, #tpu.memory_space<vmem>>, %arg2: memref<8x128xf32, #tpu.memory_space<vmem>>, %arg3: memref<128x128xbf16, #tpu.memory_space<vmem>>, %arg4: memref<8x8x128xbf16, #tpu.memory_space<vmem>>, %arg5: memref<8x128xf32, #tpu.memory_space<vmem>>, %arg6: memref<8x128xf32, #tpu.memory_space<vmem>>) attributes {dimension_semantics = [#tpu.dimension_semantics<arbitrary>], iteration_bounds = array<i64: 1>, scalar_prefetch = 0 : i64, scratch_operands = 1 : i64, tpu.core_type = #tpu.core_type<tc>, window_params = [{transform_indices = @transform_0, window_bounds = array<i64: 8, 8, 128>}, {pipeline_mode = #tpu.pipeline_mode<synchronous>, transform_indices = @transform_1, window_bounds = array<i64: 8, 128>}, {pipeline_mode = #tpu.pipeline_mode<synchronous>, transform_indices = @transform_2, window_bounds = array<i64: 128, 128>}, {transform_indices = @transform_3, window_bounds = array<i64: 8, 8, 128>}, {pipeline_mode = #tpu.pipeline_mode<synchronous>, transform_indices = @transform_4, window_bounds = array<i64: 8, 128>}]} {
    %c0_i32 = arith.constant 0 : i32
    %0 = arith.cmpi eq, %arg0, %c0_i32 : i32
    %1 = arith.extui %0 : i1 to i32
    %c0_i32_0 = arith.constant 0 : i32
    %2 = arith.cmpi ne, %1, %c0_i32_0 : i32
    scf.if %2 {
      %c0_56 = arith.constant 0 : index
      %c0_57 = arith.constant 0 : index
      %89 = vector.load %arg2[%c0_56, %c0_57] : memref<8x128xf32, #tpu.memory_space<vmem>>, vector<8x128xf32>
      %c0_58 = arith.constant 0 : index
      %c0_59 = arith.constant 0 : index
      %90 = vector.load %arg6[%c0_58, %c0_59] : memref<8x128xf32, #tpu.memory_space<vmem>>, vector<8x128xf32>
      tpu.vector_store %arg6[%c0_58, %c0_59], %89 {strides = array<i32>} : memref<8x128xf32, #tpu.memory_space<vmem>>, vector<8x128xf32>,
      %c0_60 = arith.constant 0 : index
      %c0_61 = arith.constant 0 : index
      %91 = vector.load %arg2[%c0_60, %c0_61] : memref<8x128xf32, #tpu.memory_space<vmem>>, vector<8x128xf32>
      %c0_62 = arith.constant 0 : index
      %c0_63 = arith.constant 0 : index
      %92 = vector.load %arg5[%c0_62, %c0_63] : memref<8x128xf32, #tpu.memory_space<vmem>>, vector<8x128xf32>
      tpu.vector_store %arg5[%c0_62, %c0_63], %91 {strides = array<i32>} : memref<8x128xf32, #tpu.memory_space<vmem>>, vector<8x128xf32>,
    } else {
    }
    %c0 = arith.constant 0 : index
    %c0_1 = arith.constant 0 : index
    %3 = vector.load %arg3[%c0, %c0_1] : memref<128x128xbf16, #tpu.memory_space<vmem>>, vector<128x128xbf16>
    %c0_2 = arith.constant 0 : index
    %c0_3 = arith.constant 0 : index
    %4 = vector.load %arg6[%c0_2, %c0_3] : memref<8x128xf32, #tpu.memory_space<vmem>>, vector<8x128xf32>
    %c0_4 = arith.constant 0 : index
    %c0_5 = arith.constant 0 : index
    %c0_6 = arith.constant 0 : index
    %5 = vector.load %arg1[%c0_4, %c0_5, %c0_6] : memref<8x8x128xf32, #tpu.memory_space<vmem>>, vector<1x8x128xf32>
    %6 = vector.shape_cast %5 : vector<1x8x128xf32> to vector<8x128xf32>
    %7 = arith.truncf %4 : vector<8x128xf32> to vector<8x128xbf16>
    %cst = arith.constant dense<0.000000e+00> : vector<8x128xf32>
    %8 = tpu.matmul %7, %3, %cst {dimension_numbers = #tpu.dot_dimension_numbers<[1], [0], [0], [1], [0, 0, 1, 1], [], []>} : vector<8x128xbf16>, vector<128x128xbf16>, vector<8x128xf32> -> vector<8x128xf32>
    %9 = arith.addf %6, %8 : vector<8x128xf32>
    %10 = math.tanh %9 : vector<8x128xf32>
    %11 = arith.truncf %10 : vector<8x128xf32> to vector<8x128xbf16>
    %c0_7 = arith.constant 0 : index
    %c0_8 = arith.constant 0 : index
    %c0_9 = arith.constant 0 : index
    %12 = vector.load %arg4[%c0_7, %c0_8, %c0_9] : memref<8x8x128xbf16, #tpu.memory_space<vmem>>, vector<1x8x128xbf16>
    %13 = vector.shape_cast %12 : vector<1x8x128xbf16> to vector<8x128xbf16>
    %14 = vector.shape_cast %11 : vector<8x128xbf16> to vector<1x8x128xbf16>
    tpu.vector_store %arg4[%c0_7, %c0_8, %c0_9], %14 {strides = array<i32>} : memref<8x8x128xbf16, #tpu.memory_space<vmem>>, vector<1x8x128xbf16>,
    %c1 = arith.constant 1 : index
    %c0_10 = arith.constant 0 : index
    %c0_11 = arith.constant 0 : index
    %15 = vector.load %arg1[%c1, %c0_10, %c0_11] : memref<8x8x128xf32, #tpu.memory_space<vmem>>, vector<1x8x128xf32>
    %16 = vector.shape_cast %15 : vector<1x8x128xf32> to vector<8x128xf32>
    %17 = arith.truncf %10 : vector<8x128xf32> to vector<8x128xbf16>
    %cst_12 = arith.constant dense<0.000000e+00> : vector<8x128xf32>
    %18 = tpu.matmul %17, %3, %cst_12 {dimension_numbers = #tpu.dot_dimension_numbers<[1], [0], [0], [1], [0, 0, 1, 1], [], []>} : vector<8x128xbf16>, vector<128x128xbf16>, vector<8x128xf32> -> vector<8x128xf32>
    %19 = arith.addf %16, %18 : vector<8x128xf32>
    %20 = math.tanh %19 : vector<8x128xf32>
    %21 = arith.truncf %20 : vector<8x128xf32> to vector<8x128xbf16>
    %c1_13 = arith.constant 1 : index
    %c0_14 = arith.constant 0 : index
    %c0_15 = arith.constant 0 : index
    %22 = vector.load %arg4[%c1_13, %c0_14, %c0_15] : memref<8x8x128xbf16, #tpu.memory_space<vmem>>, vector<1x8x128xbf16>
    %23 = vector.shape_cast %22 : vector<1x8x128xbf16> to vector<8x128xbf16>
    %24 = vector.shape_cast %21 : vector<8x128xbf16> to vector<1x8x128xbf16>
    tpu.vector_store %arg4[%c1_13, %c0_14, %c0_15], %24 {strides = array<i32>} : memref<8x8x128xbf16, #tpu.memory_space<vmem>>, vector<1x8x128xbf16>,
    %c2 = arith.constant 2 : index
    %c0_16 = arith.constant 0 : index
    %c0_17 = arith.constant 0 : index
    %25 = vector.load %arg1[%c2, %c0_16, %c0_17] : memref<8x8x128xf32, #tpu.memory_space<vmem>>, vector<1x8x128xf32>
    %26 = vector.shape_cast %25 : vector<1x8x128xf32> to vector<8x128xf32>
    %27 = arith.truncf %20 : vector<8x128xf32> to vector<8x128xbf16>
    %cst_18 = arith.constant dense<0.000000e+00> : vector<8x128xf32>
    %28 = tpu.matmul %27, %3, %cst_18 {dimension_numbers = #tpu.dot_dimension_numbers<[1], [0], [0], [1], [0, 0, 1, 1], [], []>} : vector<8x128xbf16>, vector<128x128xbf16>, vector<8x128xf32> -> vector<8x128xf32>
    %29 = arith.addf %26, %28 : vector<8x128xf32>
    %30 = math.tanh %29 : vector<8x128xf32>
    %31 = arith.truncf %30 : vector<8x128xf32> to vector<8x128xbf16>
    %c2_19 = arith.constant 2 : index
    %c0_20 = arith.constant 0 : index
    %c0_21 = arith.constant 0 : index
    %32 = vector.load %arg4[%c2_19, %c0_20, %c0_21] : memref<8x8x128xbf16, #tpu.memory_space<vmem>>, vector<1x8x128xbf16>
    %33 = vector.shape_cast %32 : vector<1x8x128xbf16> to vector<8x128xbf16>
    %34 = vector.shape_cast %31 : vector<8x128xbf16> to vector<1x8x128xbf16>
    tpu.vector_store %arg4[%c2_19, %c0_20, %c0_21], %34 {strides = array<i32>} : memref<8x8x128xbf16, #tpu.memory_space<vmem>>, vector<1x8x128xbf16>,
    %c3 = arith.constant 3 : index
    %c0_22 = arith.constant 0 : index
    %c0_23 = arith.constant 0 : index
    %35 = vector.load %arg1[%c3, %c0_22, %c0_23] : memref<8x8x128xf32, #tpu.memory_space<vmem>>, vector<1x8x128xf32>
    %36 = vector.shape_cast %35 : vector<1x8x128xf32> to vector<8x128xf32>
    %37 = arith.truncf %30 : vector<8x128xf32> to vector<8x128xbf16>
    %cst_24 = arith.constant dense<0.000000e+00> : vector<8x128xf32>
    %38 = tpu.matmul %37, %3, %cst_24 {dimension_numbers = #tpu.dot_dimension_numbers<[1], [0], [0], [1], [0, 0, 1, 1], [], []>} : vector<8x128xbf16>, vector<128x128xbf16>, vector<8x128xf32> -> vector<8x128xf32>
    %39 = arith.addf %36, %38 : vector<8x128xf32>
    %40 = math.tanh %39 : vector<8x128xf32>
    %41 = arith.truncf %40 : vector<8x128xf32> to vector<8x128xbf16>
    %c3_25 = arith.constant 3 : index
    %c0_26 = arith.constant 0 : index
    %c0_27 = arith.constant 0 : index
    %42 = vector.load %arg4[%c3_25, %c0_26, %c0_27] : memref<8x8x128xbf16, #tpu.memory_space<vmem>>, vector<1x8x128xbf16>
    %43 = vector.shape_cast %42 : vector<1x8x128xbf16> to vector<8x128xbf16>
    %44 = vector.shape_cast %41 : vector<8x128xbf16> to vector<1x8x128xbf16>
    tpu.vector_store %arg4[%c3_25, %c0_26, %c0_27], %44 {strides = array<i32>} : memref<8x8x128xbf16, #tpu.memory_space<vmem>>, vector<1x8x128xbf16>,
    %c4 = arith.constant 4 : index
    %c0_28 = arith.constant 0 : index
    %c0_29 = arith.constant 0 : index
    %45 = vector.load %arg1[%c4, %c0_28, %c0_29] : memref<8x8x128xf32, #tpu.memory_space<vmem>>, vector<1x8x128xf32>
    %46 = vector.shape_cast %45 : vector<1x8x128xf32> to vector<8x128xf32>
    %47 = arith.truncf %40 : vector<8x128xf32> to vector<8x128xbf16>
    %cst_30 = arith.constant dense<0.000000e+00> : vector<8x128xf32>
    %48 = tpu.matmul %47, %3, %cst_30 {dimension_numbers = #tpu.dot_dimension_numbers<[1], [0], [0], [1], [0, 0, 1, 1], [], []>} : vector<8x128xbf16>, vector<128x128xbf16>, vector<8x128xf32> -> vector<8x128xf32>
    %49 = arith.addf %46, %48 : vector<8x128xf32>
    %50 = math.tanh %49 : vector<8x128xf32>
    %51 = arith.truncf %50 : vector<8x128xf32> to vector<8x128xbf16>
    %c4_31 = arith.constant 4 : index
    %c0_32 = arith.constant 0 : index
    %c0_33 = arith.constant 0 : index
    %52 = vector.load %arg4[%c4_31, %c0_32, %c0_33] : memref<8x8x128xbf16, #tpu.memory_space<vmem>>, vector<1x8x128xbf16>
    %53 = vector.shape_cast %52 : vector<1x8x128xbf16> to vector<8x128xbf16>
    %54 = vector.shape_cast %51 : vector<8x128xbf16> to vector<1x8x128xbf16>
    tpu.vector_store %arg4[%c4_31, %c0_32, %c0_33], %54 {strides = array<i32>} : memref<8x8x128xbf16, #tpu.memory_space<vmem>>, vector<1x8x128xbf16>,
    %c5 = arith.constant 5 : index
    %c0_34 = arith.constant 0 : index
    %c0_35 = arith.constant 0 : index
    %55 = vector.load %arg1[%c5, %c0_34, %c0_35] : memref<8x8x128xf32, #tpu.memory_space<vmem>>, vector<1x8x128xf32>
    %56 = vector.shape_cast %55 : vector<1x8x128xf32> to vector<8x128xf32>
    %57 = arith.truncf %50 : vector<8x128xf32> to vector<8x128xbf16>
    %cst_36 = arith.constant dense<0.000000e+00> : vector<8x128xf32>
    %58 = tpu.matmul %57, %3, %cst_36 {dimension_numbers = #tpu.dot_dimension_numbers<[1], [0], [0], [1], [0, 0, 1, 1], [], []>} : vector<8x128xbf16>, vector<128x128xbf16>, vector<8x128xf32> -> vector<8x128xf32>
    %59 = arith.addf %56, %58 : vector<8x128xf32>
    %60 = math.tanh %59 : vector<8x128xf32>
    %61 = arith.truncf %60 : vector<8x128xf32> to vector<8x128xbf16>
    %c5_37 = arith.constant 5 : index
    %c0_38 = arith.constant 0 : index
    %c0_39 = arith.constant 0 : index
    %62 = vector.load %arg4[%c5_37, %c0_38, %c0_39] : memref<8x8x128xbf16, #tpu.memory_space<vmem>>, vector<1x8x128xbf16>
    %63 = vector.shape_cast %62 : vector<1x8x128xbf16> to vector<8x128xbf16>
    %64 = vector.shape_cast %61 : vector<8x128xbf16> to vector<1x8x128xbf16>
    tpu.vector_store %arg4[%c5_37, %c0_38, %c0_39], %64 {strides = array<i32>} : memref<8x8x128xbf16, #tpu.memory_space<vmem>>, vector<1x8x128xbf16>,
    %c6 = arith.constant 6 : index
    %c0_40 = arith.constant 0 : index
    %c0_41 = arith.constant 0 : index
    %65 = vector.load %arg1[%c6, %c0_40, %c0_41] : memref<8x8x128xf32, #tpu.memory_space<vmem>>, vector<1x8x128xf32>
    %66 = vector.shape_cast %65 : vector<1x8x128xf32> to vector<8x128xf32>
    %67 = arith.truncf %60 : vector<8x128xf32> to vector<8x128xbf16>
    %cst_42 = arith.constant dense<0.000000e+00> : vector<8x128xf32>
    %68 = tpu.matmul %67, %3, %cst_42 {dimension_numbers = #tpu.dot_dimension_numbers<[1], [0], [0], [1], [0, 0, 1, 1], [], []>} : vector<8x128xbf16>, vector<128x128xbf16>, vector<8x128xf32> -> vector<8x128xf32>
    %69 = arith.addf %66, %68 : vector<8x128xf32>
    %70 = math.tanh %69 : vector<8x128xf32>
    %71 = arith.truncf %70 : vector<8x128xf32> to vector<8x128xbf16>
    %c6_43 = arith.constant 6 : index
    %c0_44 = arith.constant 0 : index
    %c0_45 = arith.constant 0 : index
    %72 = vector.load %arg4[%c6_43, %c0_44, %c0_45] : memref<8x8x128xbf16, #tpu.memory_space<vmem>>, vector<1x8x128xbf16>
    %73 = vector.shape_cast %72 : vector<1x8x128xbf16> to vector<8x128xbf16>
    %74 = vector.shape_cast %71 : vector<8x128xbf16> to vector<1x8x128xbf16>
    tpu.vector_store %arg4[%c6_43, %c0_44, %c0_45], %74 {strides = array<i32>} : memref<8x8x128xbf16, #tpu.memory_space<vmem>>, vector<1x8x128xbf16>,
    %c7 = arith.constant 7 : index
    %c0_46 = arith.constant 0 : index
    %c0_47 = arith.constant 0 : index
    %75 = vector.load %arg1[%c7, %c0_46, %c0_47] : memref<8x8x128xf32, #tpu.memory_space<vmem>>, vector<1x8x128xf32>
    %76 = vector.shape_cast %75 : vector<1x8x128xf32> to vector<8x128xf32>
    %77 = arith.truncf %70 : vector<8x128xf32> to vector<8x128xbf16>
    %cst_48 = arith.constant dense<0.000000e+00> : vector<8x128xf32>
    %78 = tpu.matmul %77, %3, %cst_48 {dimension_numbers = #tpu.dot_dimension_numbers<[1], [0], [0], [1], [0, 0, 1, 1], [], []>} : vector<8x128xbf16>, vector<128x128xbf16>, vector<8x128xf32> -> vector<8x128xf32>
    %79 = arith.addf %76, %78 : vector<8x128xf32>
    %80 = math.tanh %79 : vector<8x128xf32>
    %81 = arith.truncf %80 : vector<8x128xf32> to vector<8x128xbf16>
    %c7_49 = arith.constant 7 : index
    %c0_50 = arith.constant 0 : index
    %c0_51 = arith.constant 0 : index
    %82 = vector.load %arg4[%c7_49, %c0_50, %c0_51] : memref<8x8x128xbf16, #tpu.memory_space<vmem>>, vector<1x8x128xbf16>
    %83 = vector.shape_cast %82 : vector<1x8x128xbf16> to vector<8x128xbf16>
    %84 = vector.shape_cast %81 : vector<8x128xbf16> to vector<1x8x128xbf16>
    tpu.vector_store %arg4[%c7_49, %c0_50, %c0_51], %84 {strides = array<i32>} : memref<8x8x128xbf16, #tpu.memory_space<vmem>>, vector<1x8x128xbf16>,
    %c0_i32_52 = arith.constant 0 : i32
    %85 = arith.cmpi eq, %arg0, %c0_i32_52 : i32
    %86 = arith.extui %85 : i1 to i32
    %c0_i32_53 = arith.constant 0 : i32
    %87 = arith.cmpi ne, %86, %c0_i32_53 : i32
    scf.if %87 {
      %c0_56 = arith.constant 0 : index
      %c0_57 = arith.constant 0 : index
      %89 = vector.load %arg5[%c0_56, %c0_57] : memref<8x128xf32, #tpu.memory_space<vmem>>, vector<8x128xf32>
      tpu.vector_store %arg5[%c0_56, %c0_57], %80 {strides = array<i32>} : memref<8x128xf32, #tpu.memory_space<vmem>>, vector<8x128xf32>,
    } else {
    }
    %c0_54 = arith.constant 0 : index
    %c0_55 = arith.constant 0 : index
    %88 = vector.load %arg6[%c0_54, %c0_55] : memref<8x128xf32, #tpu.memory_space<vmem>>, vector<8x128xf32>
    tpu.vector_store %arg6[%c0_54, %c0_55], %80 {strides = array<i32>} : memref<8x128xf32, #tpu.memory_space<vmem>>, vector<8x128xf32>,
    return
  }
  func.func @transform_0(%arg0: i32) -> (i32, i32, i32) {
    %c0_i32 = arith.constant 0 : i32
    %c0_i32_0 = arith.constant 0 : i32
    %c0_i32_1 = arith.constant 0 : i32
    return %arg0, %c0_i32, %c0_i32_0 : i32, i32, i32
  }
  func.func @transform_1(%arg0: i32) -> (i32, i32) {
    %c0_i32 = arith.constant 0 : i32
    %c0_i32_0 = arith.constant 0 : i32
    %c0_i32_1 = arith.constant 0 : i32
    return %c0_i32, %c0_i32_0 : i32, i32
  }
  func.func @transform_2(%arg0: i32) -> (i32, i32) {
    %c0_i32 = arith.constant 0 : i32
    %c0_i32_0 = arith.constant 0 : i32
    %c0_i32_1 = arith.constant 0 : i32
    return %c0_i32, %c0_i32_0 : i32, i32
  }
  func.func @transform_3(%arg0: i32) -> (i32, i32, i32) {
    %c0_i32 = arith.constant 0 : i32
    %c0_i32_0 = arith.constant 0 : i32
    %c0_i32_1 = arith.constant 0 : i32
    return %arg0, %c0_i32, %c0_i32_0 : i32, i32, i32
  }
  func.func @transform_4(%arg0: i32) -> (i32, i32) {
    %c0_i32 = arith.constant 0 : i32
    %c0_i32_0 = arith.constant 0 : i32
    %c0_i32_1 = arith.constant 0 : i32
    return %c0_i32, %c0_i32_0 : i32, i32
  }
}

</mosaic_0001>

<llo_original>
// kernel: tpu_custom_call.1
$region0: #{tpu_custom_call.1}
  #allocation0 [shape = 'u32[]', space=smem, size = 0x4, offset = 0x4, fixed_abs, tag = 'smem constant byte address 0x4 - core index']
  #allocation1 [shape = 'u32[144,128]{1,0:T(1,128)}', space=vmem, size = 0x12000, scoped, tag = 'internal scratch']
  #allocation2 [shape = 'f32[8,128]{1,0:T(8,128)}', space=vmem, size = 0x1000, scoped, tag = 'scratch operand']
  %s0 = inlined_call_operand.hbm [shape: f32[8,8,128], index: 0, kind: input, shape index: {}]
  %s1 = inlined_call_operand.hbm [shape: f32[8,128], index: 1, kind: input, shape index: {}]
  %s2 = inlined_call_operand.hbm [shape: bf16[128,128], index: 2, kind: input, shape index: {}]
  %s3 = inlined_call_operand.hbm [shape: bf16[8,8,128], index: 3, kind: output, shape index: {0}]
  %s4 = inlined_call_operand.hbm [shape: f32[8,128], index: 4, kind: output, shape index: {1}]
  %5 = xla_tuple %s3, %s4
  %s6 = sld [smem:[#allocation0]]
  $region50: #{tpu_custom_call.1} parent=0
    _
  %s8 = ssub.s32 1, %s6
  %s9 = scalar_select 0, %s8, %s6
  $region1: #{tpu_custom_call.1} parent=0
    #allocation3 [shape = 'u8[32768]{0}', space=vmem, size = 0x8000, scoped, tag = 'input window, operand 0, single buffered']
    #allocation4 [shape = 's32[1]{0}', space=sflag, size = 0x4, scoped, tag = 'scoped memory for tpu_custom_call.1']
    #allocation5 [shape = 's32[1]{0}', space=sflag, size = 0x4, scoped, tag = 'scoped memory for tpu_custom_call.1']
    #allocation6 [shape = 'u8[4096]{0}', space=vmem, size = 0x1000, scoped, tag = 'input window, operand 1, single buffered']
    #allocation7 [shape = 's32[1]{0}', space=sflag, size = 0x4, scoped, tag = 'scoped memory for tpu_custom_call.1']
    #allocation8 [shape = 'u8[32768]{0}', space=vmem, size = 0x8000, scoped, tag = 'input window, operand 2, single buffered']
    #allocation9 [shape = 'u8[16384]{0}', space=vmem, size = 0x4000, scoped, tag = 'output window, operand 0, single buffered']
    #allocation10 [shape = 'u8[4096]{0}', space=vmem, size = 0x1000, scoped, tag = 'output window, operand 1, single buffered']
    #allocation11 [shape = 's32[1]{0}', space=sflag, size = 0x4, scoped, tag = 'scoped memory for tpu_custom_call.1']
    %10 = vsyncpa [#allocation4], 0
    %11 = vsyncpa [#allocation7], 0
    %12 = vsyncpa [#allocation5], 0
    %13 = vsyncpa [#allocation11], 0
    // Predicated region
    $region2: #{tpu_custom_call.1} parent=1 // pred_check
      _
    $region3: #{tpu_custom_call.1} parent=1 // pred_check_branch
      %15 = sbr.rel (0) target = $region5
    $region4: #{tpu_custom_call.1} parent=1 // pred_region
      %s17 = ssub.s32 1024, 1024
      %18 = vsyncadd [#allocation4], %s17
      %s19 = sshll.u32 [#allocation3], 4
      %s20 = int_to_ptr.vmem [resolvable:$true] %s19
      %25 = dma.hbm_to_vmem [thread:$0]  %s0, 1024, %s20, [#allocation4], 128, 128, 8
    $region5: #{tpu_custom_call.1} parent=1 // pred_fallthru
      _
    // Predicated region
    $region6: #{tpu_custom_call.1} parent=1 // pred_check
      _
    $region7: #{tpu_custom_call.1} parent=1 // pred_check_branch
      %27 = sbr.rel (0) target = $region9
    $region8: #{tpu_custom_call.1} parent=1 // pred_region
      %s29 = ssub.s32 128, 128
      %30 = vsyncadd [#allocation7], %s29
      %s32 = sshll.u32 [#allocation6], 4
      %s33 = int_to_ptr.vmem [resolvable:$true] %s32
      %35 = dma.hbm_to_vmem [thread:$0]  %s1, 128, %s33, [#allocation7]
    $region9: #{tpu_custom_call.1} parent=1 // pred_fallthru
      _
    // Predicated region
    $region10: #{tpu_custom_call.1} parent=1 // pred_check
      _
    $region11: #{tpu_custom_call.1} parent=1 // pred_check_branch
      %37 = sbr.rel (0) target = $region13
    $region12: #{tpu_custom_call.1} parent=1 // pred_region
      %s39 = ssub.s32 1024, 1024
      %40 = vsyncadd [#allocation7], %s39
      %s41 = sshll.u32 [#allocation8], 4
      %s42 = int_to_ptr.vmem [resolvable:$true] %s41
      %47 = dma.hbm_to_vmem [thread:$0]  %s2, 1024, %s42, [#allocation7], 64, 64, 4
    $region13: #{tpu_custom_call.1} parent=1 // pred_fallthru
      _
    // Predicated region
    $region14: #{tpu_custom_call.1} parent=1 // pred_check
      _
    $region15: #{tpu_custom_call.1} parent=1 // pred_check_branch
      %49 = sbr.rel (0) target = $region17
    $region16: #{tpu_custom_call.1} parent=1 // pred_region
      %50 = dma.done [#allocation4], 1024
    $region17: #{tpu_custom_call.1} parent=1 // pred_fallthru
      _
    // Predicated region
    $region18: #{tpu_custom_call.1} parent=1 // pred_check
      _
    $region19: #{tpu_custom_call.1} parent=1 // pred_check_branch
      %52 = sbr.rel (0) target = $region21
    $region20: #{tpu_custom_call.1} parent=1 // pred_region
      %53 = dma.done [#allocation7], 128
    $region21: #{tpu_custom_call.1} parent=1 // pred_fallthru
      _
    // Predicated region
    $region22: #{tpu_custom_call.1} parent=1 // pred_check
      _
    $region23: #{tpu_custom_call.1} parent=1 // pred_check_branch
      %55 = sbr.rel (0) target = $region25
    $region24: #{tpu_custom_call.1} parent=1 // pred_region
      %56 = dma.done [#allocation7], 1024
    $region25: #{tpu_custom_call.1} parent=1 // pred_fallthru
      _
    %p58 = scmp.eq.s32.totalorder 0, 0
    // Predicated region
    $region26: #{tpu_custom_call.1} parent=1 // pred_check
      %p59 = pneg %p58
    $region27: #{tpu_custom_call.1} parent=1 // pred_check_branch
      %61 = sbr.rel (%p59) target = $region29
    $region28: #{tpu_custom_call.1} parent=1 // pred_region
      %v62 = vld [vmem:[#allocation6] sm:$0xff]
      %63 = vst [vmem:[#allocation2] sm:$0xff] %v62
      %v64 = vld [vmem:[#allocation6] sm:$0xff]
      %65 = vst [vmem:[#allocation10] sm:$0xff] %v64
    $region29: #{tpu_custom_call.1} parent=1 // pred_fallthru
      _
    %v66 = vld [vmem:[#allocation8] sm:$0xf]
    %v67 = vld [vmem:[#allocation8 + $0x4] sm:$0xf]
    %v68 = vld [vmem:[#allocation8 + $0x8] sm:$0xf]
    %v69 = vld [vmem:[#allocation8 + $0xc] sm:$0xf]
    %v70 = vld [vmem:[#allocation8 + $0x10] sm:$0xf]
    %v71 = vld [vmem:[#allocation8 + $0x14] sm:$0xf]
    %v72 = vld [vmem:[#allocation8 + $0x18] sm:$0xf]
    %v73 = vld [vmem:[#allocation8 + $0x1c] sm:$0xf]
    %v74 = vld [vmem:[#allocation8 + $0x20] sm:$0xf]
    %v75 = vld [vmem:[#allocation8 + $0x24] sm:$0xf]
    %v76 = vld [vmem:[#allocation8 + $0x28] sm:$0xf]
    %v77 = vld [vmem:[#allocation8 + $0x2c] sm:$0xf]
    %v78 = vld [vmem:[#allocation8 + $0x30] sm:$0xf]
    %v79 = vld [vmem:[#allocation8 + $0x34] sm:$0xf]
    %v80 = vld [vmem:[#allocation8 + $0x38] sm:$0xf]
    %v81 = vld [vmem:[#allocation8 + $0x3c] sm:$0xf]
    %v82 = vld [vmem:[#allocation2] sm:$0xff]
    %v83 = vld [vmem:[#allocation3] sm:$0xff]
    %v84 = vpack.c.bf16 %v82, %v82
    %v101 = vunpack.c.l.b16 %v66
    %v102 = vunpack.c.l.b16 %v67
    %v103 = vunpack.c.l.b16 %v68
    %v104 = vunpack.c.l.b16 %v69
    %v105 = vunpack.c.l.b16 %v70
    %v106 = vunpack.c.l.b16 %v71
    %v107 = vunpack.c.l.b16 %v72
    %v108 = vunpack.c.l.b16 %v73
    %v109 = vunpack.c.l.b16 %v74
    %v110 = vunpack.c.l.b16 %v75
    %v111 = vunpack.c.l.b16 %v76
    %v112 = vunpack.c.l.b16 %v77
    %v113 = vunpack.c.l.b16 %v78
    %v114 = vunpack.c.l.b16 %v79
    %v115 = vunpack.c.l.b16 %v80
    %v116 = vunpack.c.l.b16 %v81
    %v117 = vpack.c.b16 %v102, %v101
    %v118 = vpack.c.b16 %v104, %v103
    %v119 = vpack.c.b16 %v106, %v105
    %v120 = vpack.c.b16 %v108, %v107
    %v121 = vpack.c.b16 %v110, %v109
    %v122 = vpack.c.b16 %v112, %v111
    %v123 = vpack.c.b16 %v114, %v113
    %v124 = vpack.c.b16 %v116, %v115
    %133 = vmatprep.subr.bf16.mxu0 0
    %134 = vmatpush1.bf16.msra.mxu0 %v124
    %135 = vmatprep.subr.bf16.mxu0 0
    %136 = vmatpush1.bf16.msra.mxu0 %v123
    %137 = vmatprep.subr.bf16.mxu0 0
    %138 = vmatpush1.bf16.msra.mxu0 %v122
    %139 = vmatprep.subr.bf16.mxu0 0
    %140 = vmatpush1.bf16.msra.mxu0 %v121
    %141 = vmatprep.subr.bf16.mxu0 0
    %142 = vmatpush1.bf16.msra.mxu0 %v120
    %143 = vmatprep.subr.bf16.mxu0 0
    %144 = vmatpush1.bf16.msra.mxu0 %v119
    %145 = vmatprep.subr.bf16.mxu0 0
    %146 = vmatpush1.bf16.msra.mxu0 %v118
    %147 = vmatprep.subr.bf16.mxu0 0
    %148 = vmatpush1.bf16.msra.mxu0 %v117
    %149 = vmatprep.subr.bf16.mxu0 0
    %150 = vmatpush2.bf16.msra.mxu0 0
    %151 = vmatprep.subr.bf16.mxu0 0
    %152 = vmatpush2.bf16.msra.mxu0 0
    %153 = vmatprep.subr.bf16.mxu0 0
    %154 = vmatpush2.bf16.msra.mxu0 0
    %155 = vmatprep.subr.bf16.mxu0 0
    %156 = vmatpush2.bf16.msra.mxu0 0
    %157 = vmatprep.subr.bf16.mxu0 0
    %158 = vmatpush2.bf16.msra.mxu0 0
    %159 = vmatprep.subr.bf16.mxu0 0
    %160 = vmatpush2.bf16.msra.mxu0 0
    %161 = vmatprep.subr.bf16.mxu0 0
    %162 = vmatpush2.bf16.msra.mxu0 0
    %163 = vmatprep.subr.bf16.mxu0 0
    %164 = vmatpush2.bf16.msra.mxu0 0
    %165 = vmatprep.mubr.bf16.mxu0 0
    %166 = vmatmul.mubr.bf16.gmra.mxu0 %v84
    %v167 = vpop.f32.mrf.mxu0
    %v168 = vadd.f32 0.0, %v167
    %v169 = vpop.f32.mrf.mxu0
    %v170 = vpop.f32.mrf.mxu0
    %v171 = vpop.f32.mrf.mxu0
    %172 = vdwg.mxu0
    %v173 = vadd.f32 %v83, %v168
    %v174 = vtanh.pop %v173
    %v175 = vpack.c.bf16 %v174, %v174
    %176 = vst [vmem:[#allocation9] sm:$0xf] %v175
    %s177 = scalar_lea.vmem [#allocation3], 8
    %v178 = vld [vmem:[%s177] sm:$0xff]
    %179 = vmatprep.subr.bf16.mxu0 0
    %180 = vmatpush1.bf16.msra.mxu0 %v124
    %181 = vmatprep.subr.bf16.mxu0 0
    %182 = vmatpush1.bf16.msra.mxu0 %v123
    %183 = vmatprep.subr.bf16.mxu0 0
    %184 = vmatpush1.bf16.msra.mxu0 %v122
    %185 = vmatprep.subr.bf16.mxu0 0
    %186 = vmatpush1.bf16.msra.mxu0 %v121
    %187 = vmatprep.subr.bf16.mxu0 0
    %188 = vmatpush1.bf16.msra.mxu0 %v120
    %189 = vmatprep.subr.bf16.mxu0 0
    %190 = vmatpush1.bf16.msra.mxu0 %v119
    %191 = vmatprep.subr.bf16.mxu0 0
    %192 = vmatpush1.bf16.msra.mxu0 %v118
    %193 = vmatprep.subr.bf16.mxu0 0
    %194 = vmatpush1.bf16.msra.mxu0 %v117
    %195 = vmatprep.subr.bf16.mxu0 0
    %196 = vmatpush2.bf16.msra.mxu0 0
    %197 = vmatprep.subr.bf16.mxu0 0
    %198 = vmatpush2.bf16.msra.mxu0 0
    %199 = vmatprep.subr.bf16.mxu0 0
    %200 = vmatpush2.bf16.msra.mxu0 0
    %201 = vmatprep.subr.bf16.mxu0 0
    %202 = vmatpush2.bf16.msra.mxu0 0
    %203 = vmatprep.subr.bf16.mxu0 0
    %204 = vmatpush2.bf16.msra.mxu0 0
    %205 = vmatprep.subr.bf16.mxu0 0
    %206 = vmatpush2.bf16.msra.mxu0 0
    %207 = vmatprep.subr.bf16.mxu0 0
    %208 = vmatpush2.bf16.msra.mxu0 0
    %209 = vmatprep.subr.bf16.mxu0 0
    %210 = vmatpush2.bf16.msra.mxu0 0
    %211 = vmatprep.mubr.bf16.mxu0 0
    %212 = vmatmul.mubr.bf16.gmra.mxu0 %v175
    %v213 = vpop.f32.mrf.mxu0
    %v214 = vadd.f32 0.0, %v213
    %v215 = vpop.f32.mrf.mxu0
    %v216 = vpop.f32.mrf.mxu0
    %v217 = vpop.f32.mrf.mxu0
    %218 = vdwg.mxu0
    %v219 = vadd.f32 %v178, %v214
    %v220 = vtanh.pop %v219
    %v221 = vpack.c.bf16 %v220, %v220
    %s222 = scalar_lea.vmem [#allocation9], 4
    %223 = vst [vmem:[%s222] sm:$0xf] %v221
    %s224 = scalar_lea.vmem [#allocation3], 16
    %v225 = vld [vmem:[%s224] sm:$0xff]
    %226 = vmatprep.subr.bf16.mxu0 0
    %227 = vmatpush1.bf16.msra.mxu0 %v124
    %228 = vmatprep.subr.bf16.mxu0 0
    %229 = vmatpush1.bf16.msra.mxu0 %v123
    %230 = vmatprep.subr.bf16.mxu0 0
    %231 = vmatpush1.bf16.msra.mxu0 %v122
    %232 = vmatprep.subr.bf16.mxu0 0
    %233 = vmatpush1.bf16.msra.mxu0 %v121
    %234 = vmatprep.subr.bf16.mxu0 0
    %235 = vmatpush1.bf16.msra.mxu0 %v120
    %236 = vmatprep.subr.bf16.mxu0 0
    %237 = vmatpush1.bf16.msra.mxu0 %v119
    %238 = vmatprep.subr.bf16.mxu0 0
    %239 = vmatpush1.bf16.msra.mxu0 %v118
    %240 = vmatprep.subr.bf16.mxu0 0
    %241 = vmatpush1.bf16.msra.mxu0 %v117
    %242 = vmatprep.subr.bf16.mxu0 0
    %243 = vmatpush2.bf16.msra.mxu0 0
    %244 = vmatprep.subr.bf16.mxu0 0
    %245 = vmatpush2.bf16.msra.mxu0 0
    %246 = vmatprep.subr.bf16.mxu0 0
    %247 = vmatpush2.bf16.msra.mxu0 0
    %248 = vmatprep.subr.bf16.mxu0 0
    %249 = vmatpush2.bf16.msra.mxu0 0
    %250 = vmatprep.subr.bf16.mxu0 0
    %251 = vmatpush2.bf16.msra.mxu0 0
    %252 = vmatprep.subr.bf16.mxu0 0
    %253 = vmatpush2.bf16.msra.mxu0 0
    %254 = vmatprep.subr.bf16.mxu0 0
    %255 = vmatpush2.bf16.msra.mxu0 0
    %256 = vmatprep.subr.bf16.mxu0 0
    %257 = vmatpush2.bf16.msra.mxu0 0
    %258 = vmatprep.mubr.bf16.mxu0 0
    %259 = vmatmul.mubr.bf16.gmra.mxu0 %v221
    %v260 = vpop.f32.mrf.mxu0
    %v261 = vadd.f32 0.0, %v260
    %v262 = vpop.f32.mrf.mxu0
    %v263 = vpop.f32.mrf.mxu0
    %v264 = vpop.f32.mrf.mxu0
    %265 = vdwg.mxu0
    %v266 = vadd.f32 %v225, %v261
    %v267 = vtanh.pop %v266
    %v268 = vpack.c.bf16 %v267, %v267
    %s269 = scalar_lea.vmem [#allocation9], 8
    %270 = vst [vmem:[%s269] sm:$0xf] %v268
    %s271 = scalar_lea.vmem [#allocation3], 24
    %v272 = vld [vmem:[%s271] sm:$0xff]
    %273 = vmatprep.subr.bf16.mxu0 0
    %274 = vmatpush1.bf16.msra.mxu0 %v124
    %275 = vmatprep.subr.bf16.mxu0 0
    %276 = vmatpush1.bf16.msra.mxu0 %v123
    %277 = vmatprep.subr.bf16.mxu0 0
    %278 = vmatpush1.bf16.msra.mxu0 %v122
    %279 = vmatprep.subr.bf16.mxu0 0
    %280 = vmatpush1.bf16.msra.mxu0 %v121
    %281 = vmatprep.subr.bf16.mxu0 0
    %282 = vmatpush1.bf16.msra.mxu0 %v120
    %283 = vmatprep.subr.bf16.mxu0 0
    %284 = vmatpush1.bf16.msra.mxu0 %v119
    %285 = vmatprep.subr.bf16.mxu0 0
    %286 = vmatpush1.bf16.msra.mxu0 %v118
    %287 = vmatprep.subr.bf16.mxu0 0
    %288 = vmatpush1.bf16.msra.mxu0 %v117
    %289 = vmatprep.subr.bf16.mxu0 0
    %290 = vmatpush2.bf16.msra.mxu0 0
    %291 = vmatprep.subr.bf16.mxu0 0
    %292 = vmatpush2.bf16.msra.mxu0 0
    %293 = vmatprep.subr.bf16.mxu0 0
    %294 = vmatpush2.bf16.msra.mxu0 0
    %295 = vmatprep.subr.bf16.mxu0 0
    %296 = vmatpush2.bf16.msra.mxu0 0
    %297 = vmatprep.subr.bf16.mxu0 0
    %298 = vmatpush2.bf16.msra.mxu0 0
    %299 = vmatprep.subr.bf16.mxu0 0
    %300 = vmatpush2.bf16.msra.mxu0 0
    %301 = vmatprep.subr.bf16.mxu0 0
    %302 = vmatpush2.bf16.msra.mxu0 0
    %303 = vmatprep.subr.bf16.mxu0 0
    %304 = vmatpush2.bf16.msra.mxu0 0
    %305 = vmatprep.mubr.bf16.mxu0 0
    %306 = vmatmul.mubr.bf16.gmra.mxu0 %v268
    %v307 = vpop.f32.mrf.mxu0
    %v308 = vadd.f32 0.0, %v307
    %v309 = vpop.f32.mrf.mxu0
    %v310 = vpop.f32.mrf.mxu0
    %v311 = vpop.f32.mrf.mxu0
    %312 = vdwg.mxu0
    %v313 = vadd.f32 %v272, %v308
    %v314 = vtanh.pop %v313
    %v315 = vpack.c.bf16 %v314, %v314
    %s316 = scalar_lea.vmem [#allocation9], 12
    %317 = vst [vmem:[%s316] sm:$0xf] %v315
    %s318 = scalar_lea.vmem [#allocation3], 32
    %v319 = vld [vmem:[%s318] sm:$0xff]
    %320 = vmatprep.subr.bf16.mxu0 0
    %321 = vmatpush1.bf16.msra.mxu0 %v124
    %322 = vmatprep.subr.bf16.mxu0 0
    %323 = vmatpush1.bf16.msra.mxu0 %v123
    %324 = vmatprep.subr.bf16.mxu0 0
    %325 = vmatpush1.bf16.msra.mxu0 %v122
    %326 = vmatprep.subr.bf16.mxu0 0
    %327 = vmatpush1.bf16.msra.mxu0 %v121
    %328 = vmatprep.subr.bf16.mxu0 0
    %329 = vmatpush1.bf16.msra.mxu0 %v120
    %330 = vmatprep.subr.bf16.mxu0 0
    %331 = vmatpush1.bf16.msra.mxu0 %v119
    %332 = vmatprep.subr.bf16.mxu0 0
    %333 = vmatpush1.bf16.msra.mxu0 %v118
    %334 = vmatprep.subr.bf16.mxu0 0
    %335 = vmatpush1.bf16.msra.mxu0 %v117
    %336 = vmatprep.subr.bf16.mxu0 0
    %337 = vmatpush2.bf16.msra.mxu0 0
    %338 = vmatprep.subr.bf16.mxu0 0
    %339 = vmatpush2.bf16.msra.mxu0 0
    %340 = vmatprep.subr.bf16.mxu0 0
    %341 = vmatpush2.bf16.msra.mxu0 0
    %342 = vmatprep.subr.bf16.mxu0 0
    %343 = vmatpush2.bf16.msra.mxu0 0
    %344 = vmatprep.subr.bf16.mxu0 0
    %345 = vmatpush2.bf16.msra.mxu0 0
    %346 = vmatprep.subr.bf16.mxu0 0
    %347 = vmatpush2.bf16.msra.mxu0 0
    %348 = vmatprep.subr.bf16.mxu0 0
    %349 = vmatpush2.bf16.msra.mxu0 0
    %350 = vmatprep.subr.bf16.mxu0 0
    %351 = vmatpush2.bf16.msra.mxu0 0
    %352 = vmatprep.mubr.bf16.mxu0 0
    %353 = vmatmul.mubr.bf16.gmra.mxu0 %v315
    %v354 = vpop.f32.mrf.mxu0
    %v355 = vadd.f32 0.0, %v354
    %v356 = vpop.f32.mrf.mxu0
    %v357 = vpop.f32.mrf.mxu0
    %v358 = vpop.f32.mrf.mxu0
    %359 = vdwg.mxu0
    %v360 = vadd.f32 %v319, %v355
    %v361 = vtanh.pop %v360
    %v362 = vpack.c.bf16 %v361, %v361
    %s363 = scalar_lea.vmem [#allocation9], 16
    %364 = vst [vmem:[%s363] sm:$0xf] %v362
    %s365 = scalar_lea.vmem [#allocation3], 40
    %v366 = vld [vmem:[%s365] sm:$0xff]
    %367 = vmatprep.subr.bf16.mxu0 0
    %368 = vmatpush1.bf16.msra.mxu0 %v124
    %369 = vmatprep.subr.bf16.mxu0 0
    %370 = vmatpush1.bf16.msra.mxu0 %v123
    %371 = vmatprep.subr.bf16.mxu0 0
    %372 = vmatpush1.bf16.msra.mxu0 %v122
    %373 = vmatprep.subr.bf16.mxu0 0
    %374 = vmatpush1.bf16.msra.mxu0 %v121
    %375 = vmatprep.subr.bf16.mxu0 0
    %376 = vmatpush1.bf16.msra.mxu0 %v120
    %377 = vmatprep.subr.bf16.mxu0 0
    %378 = vmatpush1.bf16.msra.mxu0 %v119
    %379 = vmatprep.subr.bf16.mxu0 0
    %380 = vmatpush1.bf16.msra.mxu0 %v118
    %381 = vmatprep.subr.bf16.mxu0 0
    %382 = vmatpush1.bf16.msra.mxu0 %v117
    %383 = vmatprep.subr.bf16.mxu0 0
    %384 = vmatpush2.bf16.msra.mxu0 0
    %385 = vmatprep.subr.bf16.mxu0 0
    %386 = vmatpush2.bf16.msra.mxu0 0
    %387 = vmatprep.subr.bf16.mxu0 0
    %388 = vmatpush2.bf16.msra.mxu0 0
    %389 = vmatprep.subr.bf16.mxu0 0
    %390 = vmatpush2.bf16.msra.mxu0 0
    %391 = vmatprep.subr.bf16.mxu0 0
    %392 = vmatpush2.bf16.msra.mxu0 0
    %393 = vmatprep.subr.bf16.mxu0 0
    %394 = vmatpush2.bf16.msra.mxu0 0
    %395 = vmatprep.subr.bf16.mxu0 0
    %396 = vmatpush2.bf16.msra.mxu0 0
    %397 = vmatprep.subr.bf16.mxu0 0
    %398 = vmatpush2.bf16.msra.mxu0 0
    %399 = vmatprep.mubr.bf16.mxu0 0
    %400 = vmatmul.mubr.bf16.gmra.mxu0 %v362
    %v401 = vpop.f32.mrf.mxu0
    %v402 = vadd.f32 0.0, %v401
    %v403 = vpop.f32.mrf.mxu0
    %v404 = vpop.f32.mrf.mxu0
    %v405 = vpop.f32.mrf.mxu0
    %406 = vdwg.mxu0
    %v407 = vadd.f32 %v366, %v402
    %v408 = vtanh.pop %v407
    %v409 = vpack.c.bf16 %v408, %v408
    %s410 = scalar_lea.vmem [#allocation9], 20
    %411 = vst [vmem:[%s410] sm:$0xf] %v409
    %s412 = scalar_lea.vmem [#allocation3], 48
    %v413 = vld [vmem:[%s412] sm:$0xff]
    %414 = vmatprep.subr.bf16.mxu0 0
    %415 = vmatpush1.bf16.msra.mxu0 %v124
    %416 = vmatprep.subr.bf16.mxu0 0
    %417 = vmatpush1.bf16.msra.mxu0 %v123
    %418 = vmatprep.subr.bf16.mxu0 0
    %419 = vmatpush1.bf16.msra.mxu0 %v122
    %420 = vmatprep.subr.bf16.mxu0 0
    %421 = vmatpush1.bf16.msra.mxu0 %v121
    %422 = vmatprep.subr.bf16.mxu0 0
    %423 = vmatpush1.bf16.msra.mxu0 %v120
    %424 = vmatprep.subr.bf16.mxu0 0
    %425 = vmatpush1.bf16.msra.mxu0 %v119
    %426 = vmatprep.subr.bf16.mxu0 0
    %427 = vmatpush1.bf16.msra.mxu0 %v118
    %428 = vmatprep.subr.bf16.mxu0 0
    %429 = vmatpush1.bf16.msra.mxu0 %v117
    %430 = vmatprep.subr.bf16.mxu0 0
    %431 = vmatpush2.bf16.msra.mxu0 0
    %432 = vmatprep.subr.bf16.mxu0 0
    %433 = vmatpush2.bf16.msra.mxu0 0
    %434 = vmatprep.subr.bf16.mxu0 0
    %435 = vmatpush2.bf16.msra.mxu0 0
    %436 = vmatprep.subr.bf16.mxu0 0
    %437 = vmatpush2.bf16.msra.mxu0 0
    %438 = vmatprep.subr.bf16.mxu0 0
    %439 = vmatpush2.bf16.msra.mxu0 0
    %440 = vmatprep.subr.bf16.mxu0 0
    %441 = vmatpush2.bf16.msra.mxu0 0
    %442 = vmatprep.subr.bf16.mxu0 0
    %443 = vmatpush2.bf16.msra.mxu0 0
    %444 = vmatprep.subr.bf16.mxu0 0
    %445 = vmatpush2.bf16.msra.mxu0 0
    %446 = vmatprep.mubr.bf16.mxu0 0
    %447 = vmatmul.mubr.bf16.gmra.mxu0 %v409
    %v448 = vpop.f32.mrf.mxu0
    %v449 = vadd.f32 0.0, %v448
    %v450 = vpop.f32.mrf.mxu0
    %v451 = vpop.f32.mrf.mxu0
    %v452 = vpop.f32.mrf.mxu0
    %453 = vdwg.mxu0
    %v454 = vadd.f32 %v413, %v449
    %v455 = vtanh.pop %v454
    %v456 = vpack.c.bf16 %v455, %v455
    %s457 = scalar_lea.vmem [#allocation9], 24
    %458 = vst [vmem:[%s457] sm:$0xf] %v456
    %s459 = scalar_lea.vmem [#allocation3], 56
    %v460 = vld [vmem:[%s459] sm:$0xff]
    %461 = vmatprep.subr.bf16.mxu0 0
    %462 = vmatpush1.bf16.msra.mxu0 %v124
    %463 = vmatprep.subr.bf16.mxu0 0
    %464 = vmatpush1.bf16.msra.mxu0 %v123
    %465 = vmatprep.subr.bf16.mxu0 0
    %466 = vmatpush1.bf16.msra.mxu0 %v122
    %467 = vmatprep.subr.bf16.mxu0 0
    %468 = vmatpush1.bf16.msra.mxu0 %v121
    %469 = vmatprep.subr.bf16.mxu0 0
    %470 = vmatpush1.bf16.msra.mxu0 %v120
    %471 = vmatprep.subr.bf16.mxu0 0
    %472 = vmatpush1.bf16.msra.mxu0 %v119
    %473 = vmatprep.subr.bf16.mxu0 0
    %474 = vmatpush1.bf16.msra.mxu0 %v118
    %475 = vmatprep.subr.bf16.mxu0 0
    %476 = vmatpush1.bf16.msra.mxu0 %v117
    %477 = vmatprep.subr.bf16.mxu0 0
    %478 = vmatpush2.bf16.msra.mxu0 0
    %479 = vmatprep.subr.bf16.mxu0 0
    %480 = vmatpush2.bf16.msra.mxu0 0
    %481 = vmatprep.subr.bf16.mxu0 0
    %482 = vmatpush2.bf16.msra.mxu0 0
    %483 = vmatprep.subr.bf16.mxu0 0
    %484 = vmatpush2.bf16.msra.mxu0 0
    %485 = vmatprep.subr.bf16.mxu0 0
    %486 = vmatpush2.bf16.msra.mxu0 0
    %487 = vmatprep.subr.bf16.mxu0 0
    %488 = vmatpush2.bf16.msra.mxu0 0
    %489 = vmatprep.subr.bf16.mxu0 0
    %490 = vmatpush2.bf16.msra.mxu0 0
    %491 = vmatprep.subr.bf16.mxu0 0
    %492 = vmatpush2.bf16.msra.mxu0 0
    %493 = vmatprep.mubr.bf16.mxu0 0
    %494 = vmatmul.mubr.bf16.gmra.mxu0 %v456
    %v495 = vpop.f32.mrf.mxu0
    %v496 = vadd.f32 0.0, %v495
    %v497 = vpop.f32.mrf.mxu0
    %v498 = vpop.f32.mrf.mxu0
    %v499 = vpop.f32.mrf.mxu0
    %500 = vdwg.mxu0
    %v501 = vadd.f32 %v460, %v496
    %v502 = vtanh.pop %v501
    %v503 = vpack.c.bf16 %v502, %v502
    %s504 = scalar_lea.vmem [#allocation9], 28
    %505 = vst [vmem:[%s504] sm:$0xf] %v503
    // Predicated region
    $region30: #{tpu_custom_call.1} parent=1 // pred_check
      %p506 = pneg %p58
    $region31: #{tpu_custom_call.1} parent=1 // pred_check_branch
      %508 = sbr.rel (%p506) target = $region33
    $region32: #{tpu_custom_call.1} parent=1 // pred_region
      %509 = vst [vmem:[#allocation10] sm:$0xff] %v502
    $region33: #{tpu_custom_call.1} parent=1 // pred_fallthru
      _
    %510 = vst [vmem:[#allocation2] sm:$0xff] %v502
    // Predicated region
    $region34: #{tpu_custom_call.1} parent=1 // pred_check
      _
    $region35: #{tpu_custom_call.1} parent=1 // pred_check_branch
      %512 = sbr.rel (0) target = $region37
    $region36: #{tpu_custom_call.1} parent=1 // pred_region
      %s514 = ssub.s32 512, 512
      %515 = vsyncadd [#allocation5], %s514
      %s516 = sshll.u32 [#allocation9], 4
      %s517 = int_to_ptr.vmem [resolvable:$true] %s516
      %522 = dma.vmem_to_hbm [thread:$0]  %s517, 512, %s3, [#allocation5], 64, 64, 4
    $region37: #{tpu_custom_call.1} parent=1 // pred_fallthru
      _
    // Predicated region
    $region38: #{tpu_custom_call.1} parent=1 // pred_check
      _
    $region39: #{tpu_custom_call.1} parent=1 // pred_check_branch
      %524 = sbr.rel (0) target = $region41
    $region40: #{tpu_custom_call.1} parent=1 // pred_region
      %s526 = ssub.s32 128, 128
      %527 = vsyncadd [#allocation11], %s526
      %s529 = sshll.u32 [#allocation10], 4
      %s530 = int_to_ptr.vmem [resolvable:$true] %s529
      %532 = dma.vmem_to_hbm [thread:$0]  %s530, 128, %s4, [#allocation11]
    $region41: #{tpu_custom_call.1} parent=1 // pred_fallthru
      _
    // Predicated region
    $region42: #{tpu_custom_call.1} parent=1 // pred_check
      _
    $region43: #{tpu_custom_call.1} parent=1 // pred_check_branch
      %534 = sbr.rel (0) target = $region45
    $region44: #{tpu_custom_call.1} parent=1 // pred_region
      %535 = dma.done [#allocation5], 512
    $region45: #{tpu_custom_call.1} parent=1 // pred_fallthru
      _
    // Predicated region
    $region46: #{tpu_custom_call.1} parent=1 // pred_check
      _
    $region47: #{tpu_custom_call.1} parent=1 // pred_check_branch
      %537 = sbr.rel (0) target = $region49
    $region48: #{tpu_custom_call.1} parent=1 // pred_region
      %538 = dma.done [#allocation11], 128
    $region49: #{tpu_custom_call.1} parent=1 // pred_fallthru
      _
    %539 = vsyncpa [#allocation4], 1
    %540 = vsyncpa [#allocation7], 1
    %541 = vsyncpa [#allocation5], 1
    %542 = vsyncpa [#allocation11], 1

</llo_original>
